<compile_context>
chip_gen: v7x
topology: tpu7x:2x2x1
jax: 0.10.0
libtpu: 0.0.40
codegen_flags: <defaults>
</compile_context>

<pallas_src>
import functools

import jax
import jax.numpy as jnp
from jax.experimental import pallas as pl
from jax.experimental.pallas import tpu as pltpu


def _mse_plus_scalar_kernel(c_ref, h_ref, f_ref, o_ref):
    """o = (h - f)**2 + c, with c a precomputed SMEM scalar."""
    h = h_ref[...].astype(jnp.float32)
    f = f_ref[...].astype(jnp.float32)
    d = h - f
    o_ref[...] = (d * d + c_ref[0]).astype(o_ref.dtype)


# Tunables.
_LANES = 128        # TPU lane width (last-dim tile)
_SMALL_ROWS = 1024  # below this, one full-array block (no grid) is cheaper


def _round_up(x, m):
    return ((x + m - 1) // m) * m


def _sublane_multiple(dtype):
    size = jnp.dtype(dtype).itemsize
    if size >= 4:
        return 8
    if size == 2:
        return 16
    return 32


def _device_tuning():
    """(max_row_tile, vmem_limit_bytes) per chip generation."""
    try:
        kind = jax.devices()[0].device_kind.lower()
    except Exception:  # pragma: no cover - defensive
        kind = ""
    if "v7" in kind:
        # 64 MiB VMEM per TensorCore: cap blocks at ~4 MiB f32 per stream and
        # keep the scoped-VMEM limit well under the physical capacity.
        return 8192, 48 * 1024 * 1024
    # v5e / v6e: 128 MiB physical VMEM -> bigger blocks amortize per-step overhead.
    return 16384, 64 * 1024 * 1024


def _choose_row_tile(r, max_rows, sub):
    # Large, VMEM-budgeted blocks; step count rounded up to an even number so the
    # "parallel" grid axis splits evenly across v7x's two TensorCores (no effect
    # on single-core v5e/v6e).
    steps = max(2, pl.cdiv(r, max_rows))
    if steps % 2:
        steps += 1
    row_tile = _round_up(pl.cdiv(r, steps), sub)
    return max(sub, min(row_tile, max_rows))


def _single_block_call(c, h2, f2, out_dtype):
    # Whole-array block, kernel runs once (grid = ()).
    return pl.pallas_call(
        _mse_plus_scalar_kernel,
        out_shape=jax.ShapeDtypeStruct(h2.shape, out_dtype),
        in_specs=[
            pl.BlockSpec(memory_space=pltpu.MemorySpace.SMEM),
            pl.BlockSpec(memory_space=pltpu.MemorySpace.VMEM),
            pl.BlockSpec(memory_space=pltpu.MemorySpace.VMEM),
        ],
        out_specs=pl.BlockSpec(memory_space=pltpu.MemorySpace.VMEM),
    )(c, h2, f2)


def _tiled_call(c, h2, f2, out_dtype, row_tile, vmem_limit_bytes):
    r = h2.shape[0]
    grid = (pl.cdiv(r, row_tile),)  # ragged last tile handled by Pallas masking
    return pl.pallas_call(
        _mse_plus_scalar_kernel,
        out_shape=jax.ShapeDtypeStruct((r, _LANES), out_dtype),
        grid=grid,
        in_specs=[
            pl.BlockSpec(memory_space=pltpu.MemorySpace.SMEM),
            pl.BlockSpec((row_tile, _LANES), lambda i: (i, 0)),
            pl.BlockSpec((row_tile, _LANES), lambda i: (i, 0)),
        ],
        out_specs=pl.BlockSpec((row_tile, _LANES), lambda i: (i, 0)),
        compiler_params=pltpu.CompilerParams(
            dimension_semantics=("parallel",),
            vmem_limit_bytes=vmem_limit_bytes,
        ),
    )(c, h2, f2)


@functools.partial(jax.jit, static_argnames=("hyper_alpha", "out_dtype"))
def mixture_loss_feature(heatmap, feature_received, mask, hyper_alpha=10.0,
                         out_dtype=jnp.float32):
    """Pallas implementation of MixtureLossFeature.forward.

    out_dtype defaults to f32 (matches torch's .float()); pass jnp.bfloat16 to
    cut store traffic on this bandwidth-bound kernel if f32 precision is not
    required downstream.
    """
    assert heatmap.ndim == 2, "expects a 2-D heatmap (H, W)"
    assert feature_received.shape == heatmap.shape
    H, W = heatmap.shape
    total_pixels = H * W

    # Hoisted scalar term: hyper_alpha * sum(mask) / (H*W). One XLA reduction in
    # the mask's native dtype (fused under the same jit as the pallas_call).
    c = (jnp.float32(hyper_alpha)
         * jnp.sum(mask, dtype=jnp.float32) / jnp.float32(total_pixels))
    c = c.reshape((1,))

    # Always go through the lane-dense (R, 128) slab: pad the flat view if the
    # total size isn't a multiple of 128 lanes, then slice the result back.
    pad = (-total_pixels) % _LANES
    flat_h = heatmap.reshape(-1)
    flat_f = feature_received.reshape(-1)
    if pad:
        flat_h = jnp.pad(flat_h, (0, pad))
        flat_f = jnp.pad(flat_f, (0, pad))
    r = (total_pixels + pad) // _LANES
    h2 = flat_h.reshape(r, _LANES)
    f2 = flat_f.reshape(r, _LANES)

    if r < _SMALL_ROWS:
        out = _single_block_call(c, h2, f2, out_dtype)
    else:
        max_rows, vmem_limit_bytes = _device_tuning()
        sub = max(_sublane_multiple(heatmap.dtype),
                  _sublane_multiple(feature_received.dtype))
        row_tile = _choose_row_tile(r, max_rows, sub)
        out = _tiled_call(c, h2, f2, out_dtype, row_tile, vmem_limit_bytes)

    out = out.reshape(-1)
    if pad:
        out = out[:total_pixels]
    return out.reshape(H, W)


def _reference(heatmap, feature_received, mask, hyper_alpha):
    loss1 = (heatmap.astype(jnp.float32) - feature_received.astype(jnp.float32)) ** 2
    loss2 = jnp.sum(mask.astype(jnp.float32)) / (heatmap.shape[0] * heatmap.shape[1])
    return loss1 + hyper_alpha * loss2


if __name__ == "__main__":
    key = jax.random.PRNGKey(0)
    keys = jax.random.split(key, 9)

    # 1) Small 2-D heatmap (single-block path).
    H, W = 16, 128
    heatmap = jax.random.normal(keys[0], (H, W), dtype=jnp.float32)
    feature_received = jax.random.normal(keys[1], (H, W), dtype=jnp.float32)
    mask = (jax.random.uniform(keys[2], (H, W)) > 0.5).astype(jnp.float32)

    out = mixture_loss_feature(heatmap, feature_received, mask, hyper_alpha=10.0)
    out = jax.block_until_ready(out)
    ref = _reference(heatmap, feature_received, mask, 10.0)
    assert jnp.allclose(out, ref, atol=1e-5, rtol=1e-5), "mismatch (small path)"

    # 2) Moderately sized bf16 input (tiled, lane-dense streaming path).
    H2, W2 = 2048, 256
    heatmap2 = jax.random.normal(keys[3], (H2, W2), dtype=jnp.bfloat16)
    feature2 = jax.random.normal(keys[4], (H2, W2), dtype=jnp.bfloat16)
    mask2 = (jax.random.uniform(keys[5], (H2, W2)) > 0.5)  # bool mask (native dtype)

    out2 = mixture_loss_feature(heatmap2, feature2, mask2, hyper_alpha=10.0)
    out2 = jax.block_until_ready(out2)
    ref2 = _reference(heatmap2, feature2, mask2, 10.0)
    assert jnp.allclose(out2, ref2, atol=1e-4, rtol=1e-4), "mismatch (tiled path)"

    # 3) Shape whose total size is not a multiple of 128 (padded lane-dense path).
    H3, W3 = 50, 37
    heatmap3 = jax.random.normal(keys[6], (H3, W3), dtype=jnp.float32)
    feature3 = jax.random.normal(keys[7], (H3, W3), dtype=jnp.float32)
    mask3 = (jax.random.uniform(keys[8], (H3, W3)) > 0.5).astype(jnp.float32)

    out3 = mixture_loss_feature(heatmap3, feature3, mask3, hyper_alpha=10.0)
    out3 = jax.block_until_ready(out3)
    ref3 = _reference(heatmap3, feature3, mask3, 10.0)
    assert jnp.allclose(out3, ref3, atol=1e-5, rtol=1e-5), "mismatch (padded path)"

    print("KERNEL_OK")
</pallas_src>

<mosaic_0001>
module attributes {stable_mosaic.version = 11 : i64} {
  func.func @_mse_plus_scalar_kernel(%arg0: memref<1xf32, #tpu.memory_space<smem>>, %arg1: memref<16x128xf32, #tpu.memory_space<vmem>>, %arg2: memref<16x128xf32, #tpu.memory_space<vmem>>, %arg3: memref<16x128xf32, #tpu.memory_space<vmem>>) attributes {dimension_semantics = [], scalar_prefetch = 0 : i64, scratch_operands = 0 : i64, tpu.core_type = #tpu.core_type<tc>} {
    %c0 = arith.constant 0 : index
    %c0_0 = arith.constant 0 : index
    %0 = vector.load %arg1[%c0, %c0_0] : memref<16x128xf32, #tpu.memory_space<vmem>>, vector<16x128xf32>
    %c0_1 = arith.constant 0 : index
    %c0_2 = arith.constant 0 : index
    %1 = vector.load %arg2[%c0_1, %c0_2] : memref<16x128xf32, #tpu.memory_space<vmem>>, vector<16x128xf32>
    %2 = arith.subf %0, %1 : vector<16x128xf32>
    %3 = arith.mulf %2, %2 : vector<16x128xf32>
    %c0_3 = arith.constant 0 : index
    %4 = memref.load %arg0[%c0_3] : memref<1xf32, #tpu.memory_space<smem>>
    %5 = vector.broadcast %4 : f32 to vector<16x128xf32>
    %6 = arith.addf %3, %5 : vector<16x128xf32>
    %c0_4 = arith.constant 0 : index
    %c0_5 = arith.constant 0 : index
    %7 = vector.load %arg3[%c0_4, %c0_5] : memref<16x128xf32, #tpu.memory_space<vmem>>, vector<16x128xf32>
    tpu.vector_store %arg3[%c0_4, %c0_5], %6 {strides = array<i32>} : memref<16x128xf32, #tpu.memory_space<vmem>>, vector<16x128xf32>,
    return
  }
}

</mosaic_0001>

<llo_original>
// kernel: mixture_loss_feature.1
$region0: #{mixture_loss_feature.1}
  #allocation0 [shape = 'u32[]', space=smem, size = 0x4, offset = 0x4, fixed_abs, tag = 'smem constant byte address 0x4 - core index']
  #allocation1 [shape = 'u32[144,128]{1,0:T(1,128)}', space=vmem, size = 0x12000, scoped, tag = 'internal scratch']
  #allocation2 [shape = 'f32[1]{0:T(128)S(6)}', space=smem, size = 0x200, scoped, tag = 'scoped memory for mixture_loss_feature.1']
  %s0 = inlined_call_operand.<no memory space> [shape: f32[1], index: 0, kind: input, shape index: {}]
  %s1 = inlined_call_operand.vmem [shape: f32[16,128], index: 1, kind: input, shape index: {}]
  %s2 = inlined_call_operand.hbm [shape: f32[16,128], index: 2, kind: input, shape index: {}]
  %s3 = inlined_call_operand.hbm [shape: f32[16,128], index: 3, kind: output, shape index: {}]
  %s4 = sld [smem:[#allocation0]]
  $region26: #{mixture_loss_feature.1} parent=0
    _
  %s6 = ssub.s32 1, %s4
  %s7 = scalar_select 0, %s6, %s4
  %8 = sst [smem:[#allocation2]] %s0
  $region1: #{mixture_loss_feature.1} parent=0
    #allocation3 [shape = 'u8[8192]{0}', space=vmem, size = 0x2000, scoped, tag = 'input window, operand 2, single buffered']
    #allocation4 [shape = 's32[1]{0}', space=sflag, size = 0x4, scoped, tag = 'scoped memory for mixture_loss_feature.1']
    #allocation5 [shape = 's32[1]{0}', space=sflag, size = 0x4, scoped, tag = 'scoped memory for mixture_loss_feature.1']
    #allocation6 [shape = 'u8[8192]{0}', space=vmem, size = 0x2000, scoped, tag = 'output window, operand 0, single buffered']
    %9 = vsyncpa [#allocation4], 0
    %10 = vsyncpa [#allocation5], 0
    // Predicated region
    $region2: #{mixture_loss_feature.1} parent=1 // pred_check
      _
    $region3: #{mixture_loss_feature.1} parent=1 // pred_check_branch
      %12 = sbr.rel (0) target = $region5
    $region4: #{mixture_loss_feature.1} parent=1 // pred_region
      _
    $region5: #{mixture_loss_feature.1} parent=1 // pred_fallthru
      _
    // Predicated region
    $region6: #{mixture_loss_feature.1} parent=1 // pred_check
      _
    $region7: #{mixture_loss_feature.1} parent=1 // pred_check_branch
      %14 = sbr.rel (0) target = $region9
    $region8: #{mixture_loss_feature.1} parent=1 // pred_region
      _
    $region9: #{mixture_loss_feature.1} parent=1 // pred_fallthru
      _
    // Predicated region
    $region10: #{mixture_loss_feature.1} parent=1 // pred_check
      _
    $region11: #{mixture_loss_feature.1} parent=1 // pred_check_branch
      %16 = sbr.rel (0) target = $region13
    $region12: #{mixture_loss_feature.1} parent=1 // pred_region
      %s18 = ssub.s32 256, 256
      %19 = vsyncadd [#allocation4], %s18
      %s20 = sshll.u32 [#allocation3], 4
      %s21 = int_to_ptr.vmem [resolvable:$true] %s20
      %26 = dma.hbm_to_vmem [thread:$0]  %s2, 256, %s21, [#allocation4], 128, 128, 8
    $region13: #{mixture_loss_feature.1} parent=1 // pred_fallthru
      _
    // Predicated region
    $region14: #{mixture_loss_feature.1} parent=1 // pred_check
      _
    $region15: #{mixture_loss_feature.1} parent=1 // pred_check_branch
      %28 = sbr.rel (0) target = $region17
    $region16: #{mixture_loss_feature.1} parent=1 // pred_region
      %29 = dma.done [#allocation4], 256
    $region17: #{mixture_loss_feature.1} parent=1 // pred_fallthru
      _
    %v30 = vld [vmem:[%s1] sm:$0xff]
    %v31 = vld [vmem:[%s1 + $0x8] sm:$0xff]
    %v32 = vld [vmem:[#allocation3] sm:$0xff]
    %v33 = vld [vmem:[#allocation3 + $0x8] sm:$0xff]
    %v34 = vsub.f32 %v30, %v32
    %v35 = vsub.f32 %v31, %v33
    %v36 = vmul.f32 %v34, %v34
    %v37 = vmul.f32 %v35, %v35
    %s38 = sld [smem:[#allocation2]]
    %v39 = vstv %s38
    %v40 = vadd.f32 %v36, %v39
    %v41 = vadd.f32 %v37, %v39
    %42 = vst [vmem:[#allocation6] sm:$0xff] %v40
    %43 = vst [vmem:[#allocation6 + $0x8] sm:$0xff] %v41
    // Predicated region
    $region18: #{mixture_loss_feature.1} parent=1 // pred_check
      _
    $region19: #{mixture_loss_feature.1} parent=1 // pred_check_branch
      %45 = sbr.rel (0) target = $region21
    $region20: #{mixture_loss_feature.1} parent=1 // pred_region
      %s47 = ssub.s32 256, 256
      %48 = vsyncadd [#allocation5], %s47
      %s49 = sshll.u32 [#allocation6], 4
      %s50 = int_to_ptr.vmem [resolvable:$true] %s49
      %55 = dma.vmem_to_hbm [thread:$0]  %s50, 256, %s3, [#allocation5], 128, 128, 8
    $region21: #{mixture_loss_feature.1} parent=1 // pred_fallthru
      _
    // Predicated region
    $region22: #{mixture_loss_feature.1} parent=1 // pred_check
      _
    $region23: #{mixture_loss_feature.1} parent=1 // pred_check_branch
      %57 = sbr.rel (0) target = $region25
    $region24: #{mixture_loss_feature.1} parent=1 // pred_region
      %58 = dma.done [#allocation5], 256
    $region25: #{mixture_loss_feature.1} parent=1 // pred_fallthru
      _
    %59 = vsyncpa [#allocation4], 1
    %60 = vsyncpa [#allocation5], 1

</llo_original>
